<compile_context>
chip_gen: v6e
topology: v6e:2x2x1
jax: 0.10.0
libtpu: 0.0.40
codegen_flags: <defaults>
</compile_context>

<pallas_src>
import jax
import jax.numpy as jnp
from jax import lax
from jax.experimental import pallas as pl
from jax.experimental.pallas import tpu as pltpu


def _round_up(x, m):
    return (x + m - 1) // m * m


def _pick_tile(dim, desired, granule, min_tiles=1):
    """Largest multiple of `granule` that divides `dim` (itself a multiple of
    `granule`), is <= `desired`, and -- when possible -- yields >= `min_tiles`
    tiles. Guarantees tiles evenly cover the 128/8-aligned padded dims, so no
    zero padding beyond hardware alignment is ever streamed."""
    if dim // granule >= min_tiles:
        cap = min(desired, dim // min_tiles)
    else:
        cap = min(desired, dim)
    cap = max(granule, (cap // granule) * granule)
    for t in range(cap, granule - 1, -granule):
        if dim % t == 0:
            return t
    return granule


def sum_linear_kernel(x_ref, w_ref, b_ref, o_ref, w_acc_ref, acc_ref):
    """grid = (B_tiles, N_tiles, K_tiles, L); B/N parallel, K/L reductions.

    x_ref:     (tb, tk)  input tile, original dtype (upcast in-kernel)
    w_ref:     (tn, tk)  layer-l weight tile, PyTorch (D_out, D_in) layout
    b_ref:     (1, tn)   pre-summed f32 bias tile (sum_l b_l)
    o_ref:     (tb, tn)  output tile in x.dtype (written once, at finalize)
    w_acc_ref: (tn, tk)  f32 scratch accumulating sum_l W_l for this tile
    acc_ref:   (tb, tn)  f32 accumulator for the matmul over K
    """
    k = pl.program_id(2)
    l = pl.program_id(3)
    nk = pl.num_programs(2)
    nl = pl.num_programs(3)

    # --- sum over layers: straight copy at l==0 (no zero store + re-read),
    #     then pure VPU adds hidden under the W_l DMA stream. Accumulation is
    #     f32 regardless of the streamed weight dtype.
    @pl.when(l == 0)
    def _copy_w():
        w_acc_ref[...] = w_ref[...].astype(jnp.float32)

    @pl.when(l > 0)
    def _add_w():
        w_acc_ref[...] += w_ref[...].astype(jnp.float32)

    # --- once per K step: a single MXU matmul against the summed weights ----
    @pl.when((l == nl - 1) & (k == 0))
    def _init_acc():
        # Fold the pre-summed bias into the accumulator init.
        acc_ref[...] = jnp.broadcast_to(
            b_ref[...].astype(jnp.float32), acc_ref.shape
        )

    @pl.when(l == nl - 1)
    def _matmul():
        # Contract x's K dim with W's K dim directly in PyTorch layout
        # (x @ W_sum^T) -- no explicit transpose of the weight tile.
        acc_ref[...] += lax.dot_general(
            x_ref[...].astype(jnp.float32),
            w_acc_ref[...],
            dimension_numbers=(((1,), (1,)), ((), ())),
            preferred_element_type=jnp.float32,
        )

    @pl.when((l == nl - 1) & (k == nk - 1))
    def _finalize():
        o_ref[...] = acc_ref[...].astype(o_ref.dtype)


def sum_of_linears(x, weights, biases, *, tile_b=256, tile_n=256, tile_k=1024):
    """out = sum_i (x @ W_i^T + b_i).

    x:       [B, D_in]
    weights: [L, D_out, D_in]   (stacked PyTorch nn.Linear weights, any float dtype)
    biases:  [L, D_out]
    """
    B, D_in = x.shape
    L, D_out, _ = weights.shape

    # Biases are tiny: pre-sum once in the wrapper (glue, not the hot loop).
    b_sum = jnp.sum(biases.astype(jnp.float32), axis=0).reshape(1, D_out)

    # Pad ONLY to hardware alignment (8 sublanes / 128 lanes), and only when
    # strictly needed -- never to tile multiples -- so the dominant W stream
    # carries no wasted bytes and keeps its original dtype.
    Bp = _round_up(B, 8)
    N128 = _round_up(D_out, 128)
    K128 = _round_up(D_in, 128)

    tb = _pick_tile(Bp, tile_b, 8)
    # Prefer >=2 N tiles so v7x's second TensorCore gets fed even when the
    # batch is a single tile (batch axis below is the second 'parallel' lever).
    tn = _pick_tile(N128, tile_n, 128, min_tiles=2)
    tk = _pick_tile(K128, tile_k, 128)

    x_p = x
    if (Bp, K128) != (B, D_in):
        x_p = jnp.pad(x, ((0, Bp - B), (0, K128 - D_in)))
    w_p = weights
    if (N128, K128) != (D_out, D_in):
        w_p = jnp.pad(weights, ((0, 0), (0, N128 - D_out), (0, K128 - D_in)))
    b_p = b_sum
    if N128 != D_out:
        b_p = jnp.pad(b_sum, ((0, 0), (0, N128 - D_out)))

    grid = (Bp // tb, N128 // tn, K128 // tk, L)

    out = pl.pallas_call(
        sum_linear_kernel,
        out_shape=jax.ShapeDtypeStruct((Bp, N128), x.dtype),
        grid_spec=pltpu.PrefetchScalarGridSpec(
            num_scalar_prefetch=0,
            grid=grid,
            in_specs=[
                # x tile: per (batch-tile, K-slice); reused across L (block
                # index unchanged across the innermost axis -> no re-DMA).
                pl.BlockSpec((tb, tk), lambda b, n, k, l: (b, k)),
                # W_l tile in PyTorch (D_out, D_in) layout; L dim squeezed;
                # streamed in its original dtype (bf16 halves HBM bytes).
                pl.BlockSpec((pl.Squeezed(), tn, tk), lambda b, n, k, l: (l, n, k)),
                # Pre-summed bias tile (only read at accumulator init).
                pl.BlockSpec((1, tn), lambda b, n, k, l: (0, n)),
            ],
            # Output tile owned by (b, n); written once at finalize in x.dtype.
            out_specs=pl.BlockSpec((tb, tn), lambda b, n, k, l: (b, n)),
            scratch_shapes=[
                pltpu.VMEM((tn, tk), jnp.float32),  # sum_l W_l
                pltpu.VMEM((tb, tn), jnp.float32),  # f32 matmul accumulator
            ],
        ),
        compiler_params=pltpu.CompilerParams(
            # B and N tiles shard across TensorCores (v7x megacore); K and L
            # are sequential reduction axes, kept last in the grid.
            dimension_semantics=("parallel", "parallel", "arbitrary", "arbitrary"),
        ),
    )(x_p, w_p, b_p)

    return out[:B, :D_out]


if __name__ == "__main__":
    # Small, deterministic problem: Sum of L=3 Linear(32 -> 32) layers on a
    # batch of 8 vectors (padded to 128 lanes inside the wrapper).
    B, D_in, D_out, L = 8, 32, 32, 3

    key = jax.random.PRNGKey(0)
    kx, kw, kb = jax.random.split(key, 3)
    x = jax.random.normal(kx, (B, D_in), dtype=jnp.float32)
    weights = jax.random.normal(kw, (L, D_out, D_in), dtype=jnp.float32) * 0.1
    biases = jax.random.normal(kb, (L, D_out), dtype=jnp.float32) * 0.1

    out = sum_of_linears(x, weights, biases)
    out = jax.block_until_ready(out)

    # Pure-JAX reference of Sum.forward: stack per-layer outputs, sum over dim 0.
    ref = jnp.stack(
        [x @ weights[i].T + biases[i] for i in range(L)], axis=0
    ).sum(axis=0)

    assert out.shape == (B, D_out)
    assert out.dtype == x.dtype
    assert jnp.allclose(out, ref, atol=1e-4, rtol=1e-4)
    print("KERNEL_OK")
</pallas_src>

<mosaic_0001>
module attributes {stable_mosaic.version = 11 : i64} {
  func.func @sum_linear_kernel(%arg0: i32, %arg1: i32, %arg2: i32, %arg3: i32, %arg4: memref<8x128xf32, #tpu.memory_space<vmem>>, %arg5: memref<1x128x128xf32, #tpu.memory_space<vmem>>, %arg6: memref<1x128xf32, #tpu.memory_space<vmem>>, %arg7: memref<8x128xf32, #tpu.memory_space<vmem>>, %arg8: memref<128x128xf32, #tpu.memory_space<vmem>>, %arg9: memref<8x128xf32, #tpu.memory_space<vmem>>) attributes {dimension_semantics = [#tpu.dimension_semantics<parallel>, #tpu.dimension_semantics<parallel>, #tpu.dimension_semantics<arbitrary>, #tpu.dimension_semantics<arbitrary>], iteration_bounds = array<i64: 1, 1, 1, 3>, scalar_prefetch = 0 : i64, scratch_operands = 2 : i64, tpu.core_type = #tpu.core_type<tc>, window_params = [{transform_indices = @transform_0, window_bounds = array<i64: 8, 128>}, {transform_indices = @transform_1, window_bounds = array<i64: 1, 128, 128>}, {transform_indices = @transform_2, window_bounds = array<i64: 1, 128>}, {transform_indices = @transform_3, window_bounds = array<i64: 8, 128>}]} {
    %c0_i32 = arith.constant 0 : i32
    %0 = arith.cmpi eq, %arg3, %c0_i32 : i32
    %1 = arith.extui %0 : i1 to i32
    %c0_i32_0 = arith.constant 0 : i32
    %2 = arith.cmpi ne, %1, %c0_i32_0 : i32
    scf.if %2 {
      %c0 = arith.constant 0 : index
      %c0_10 = arith.constant 0 : index
      %c0_11 = arith.constant 0 : index
      %19 = vector.load %arg5[%c0, %c0_10, %c0_11] : memref<1x128x128xf32, #tpu.memory_space<vmem>>, vector<1x128x128xf32>
      %20 = vector.shape_cast %19 : vector<1x128x128xf32> to vector<128x128xf32>
      %c0_12 = arith.constant 0 : index
      %c0_13 = arith.constant 0 : index
      %21 = vector.load %arg8[%c0_12, %c0_13] : memref<128x128xf32, #tpu.memory_space<vmem>>, vector<128x128xf32>
      tpu.vector_store %arg8[%c0_12, %c0_13], %20 {strides = array<i32>} : memref<128x128xf32, #tpu.memory_space<vmem>>, vector<128x128xf32>,
    } else {
    }
    %c0_i32_1 = arith.constant 0 : i32
    %3 = arith.cmpi sgt, %arg3, %c0_i32_1 : i32
    %4 = arith.extui %3 : i1 to i32
    %c0_i32_2 = arith.constant 0 : i32
    %5 = arith.cmpi ne, %4, %c0_i32_2 : i32
    scf.if %5 {
      %c0 = arith.constant 0 : index
      %c0_10 = arith.constant 0 : index
      %19 = vector.load %arg8[%c0, %c0_10] : memref<128x128xf32, #tpu.memory_space<vmem>>, vector<128x128xf32>
      %c0_11 = arith.constant 0 : index
      %c0_12 = arith.constant 0 : index
      %c0_13 = arith.constant 0 : index
      %20 = vector.load %arg5[%c0_11, %c0_12, %c0_13] : memref<1x128x128xf32, #tpu.memory_space<vmem>>, vector<1x128x128xf32>
      %21 = vector.shape_cast %20 : vector<1x128x128xf32> to vector<128x128xf32>
      %22 = arith.addf %19, %21 : vector<128x128xf32>
      %c0_14 = arith.constant 0 : index
      %c0_15 = arith.constant 0 : index
      %23 = vector.load %arg8[%c0_14, %c0_15] : memref<128x128xf32, #tpu.memory_space<vmem>>, vector<128x128xf32>
      tpu.vector_store %arg8[%c0_14, %c0_15], %22 {strides = array<i32>} : memref<128x128xf32, #tpu.memory_space<vmem>>, vector<128x128xf32>,
    } else {
    }
    %c2_i32 = arith.constant 2 : i32
    %6 = arith.cmpi eq, %arg3, %c2_i32 : i32
    %c0_i32_3 = arith.constant 0 : i32
    %7 = arith.cmpi eq, %arg2, %c0_i32_3 : i32
    %8 = arith.andi %6, %7 : i1
    %9 = arith.extui %8 : i1 to i32
    %c0_i32_4 = arith.constant 0 : i32
    %10 = arith.cmpi ne, %9, %c0_i32_4 : i32
    scf.if %10 {
      %c0 = arith.constant 0 : index
      %c0_10 = arith.constant 0 : index
      %19 = vector.load %arg6[%c0, %c0_10] : memref<1x128xf32, #tpu.memory_space<vmem>>, vector<1x128xf32>
      %20 = vector.shape_cast %19 : vector<1x128xf32> to vector<1x128xf32>
      %21 = vector.broadcast %20 : vector<1x128xf32> to vector<8x128xf32>
      %c0_11 = arith.constant 0 : index
      %c0_12 = arith.constant 0 : index
      %22 = vector.load %arg9[%c0_11, %c0_12] : memref<8x128xf32, #tpu.memory_space<vmem>>, vector<8x128xf32>
      tpu.vector_store %arg9[%c0_11, %c0_12], %21 {strides = array<i32>} : memref<8x128xf32, #tpu.memory_space<vmem>>, vector<8x128xf32>,
    } else {
    }
    %c2_i32_5 = arith.constant 2 : i32
    %11 = arith.cmpi eq, %arg3, %c2_i32_5 : i32
    %12 = arith.extui %11 : i1 to i32
    %c0_i32_6 = arith.constant 0 : i32
    %13 = arith.cmpi ne, %12, %c0_i32_6 : i32
    scf.if %13 {
      %c0 = arith.constant 0 : index
      %c0_10 = arith.constant 0 : index
      %19 = vector.load %arg9[%c0, %c0_10] : memref<8x128xf32, #tpu.memory_space<vmem>>, vector<8x128xf32>
      %c0_11 = arith.constant 0 : index
      %c0_12 = arith.constant 0 : index
      %20 = vector.load %arg4[%c0_11, %c0_12] : memref<8x128xf32, #tpu.memory_space<vmem>>, vector<8x128xf32>
      %c0_13 = arith.constant 0 : index
      %c0_14 = arith.constant 0 : index
      %21 = vector.load %arg8[%c0_13, %c0_14] : memref<128x128xf32, #tpu.memory_space<vmem>>, vector<128x128xf32>
      %cst = arith.constant dense<0.000000e+00> : vector<8x128xf32>
      %22 = tpu.matmul %20, %21, %cst {dimension_numbers = #tpu.dot_dimension_numbers<[1], [1], [0], [0], [0, 0, 1, 0], [], []>} : vector<8x128xf32>, vector<128x128xf32>, vector<8x128xf32> -> vector<8x128xf32>
      %23 = arith.addf %19, %22 : vector<8x128xf32>
      %c0_15 = arith.constant 0 : index
      %c0_16 = arith.constant 0 : index
      %24 = vector.load %arg9[%c0_15, %c0_16] : memref<8x128xf32, #tpu.memory_space<vmem>>, vector<8x128xf32>
      tpu.vector_store %arg9[%c0_15, %c0_16], %23 {strides = array<i32>} : memref<8x128xf32, #tpu.memory_space<vmem>>, vector<8x128xf32>,
    } else {
    }
    %c2_i32_7 = arith.constant 2 : i32
    %14 = arith.cmpi eq, %arg3, %c2_i32_7 : i32
    %c0_i32_8 = arith.constant 0 : i32
    %15 = arith.cmpi eq, %arg2, %c0_i32_8 : i32
    %16 = arith.andi %14, %15 : i1
    %17 = arith.extui %16 : i1 to i32
    %c0_i32_9 = arith.constant 0 : i32
    %18 = arith.cmpi ne, %17, %c0_i32_9 : i32
    scf.if %18 {
      %c0 = arith.constant 0 : index
      %c0_10 = arith.constant 0 : index
      %19 = vector.load %arg9[%c0, %c0_10] : memref<8x128xf32, #tpu.memory_space<vmem>>, vector<8x128xf32>
      %c0_11 = arith.constant 0 : index
      %c0_12 = arith.constant 0 : index
      %20 = vector.load %arg7[%c0_11, %c0_12] : memref<8x128xf32, #tpu.memory_space<vmem>>, vector<8x128xf32>
      tpu.vector_store %arg7[%c0_11, %c0_12], %19 {strides = array<i32>} : memref<8x128xf32, #tpu.memory_space<vmem>>, vector<8x128xf32>,
    } else {
    }
    return
  }
  func.func @transform_0(%arg0: i32, %arg1: i32, %arg2: i32, %arg3: i32) -> (i32, i32) {
    %c0_i32 = arith.constant 0 : i32
    return %arg0, %arg2 : i32, i32
  }
  func.func @transform_1(%arg0: i32, %arg1: i32, %arg2: i32, %arg3: i32) -> (i32, i32, i32) {
    %c0_i32 = arith.constant 0 : i32
    return %arg3, %arg1, %arg2 : i32, i32, i32
  }
  func.func @transform_2(%arg0: i32, %arg1: i32, %arg2: i32, %arg3: i32) -> (i32, i32) {
    %c0_i32 = arith.constant 0 : i32
    %c0_i32_0 = arith.constant 0 : i32
    return %c0_i32, %arg1 : i32, i32
  }
  func.func @transform_3(%arg0: i32, %arg1: i32, %arg2: i32, %arg3: i32) -> (i32, i32) {
    %c0_i32 = arith.constant 0 : i32
    return %arg0, %arg1 : i32, i32
  }
}

</mosaic_0001>

<llo_original>
// kernel: tpu_custom_call.1
$region0: #{tpu_custom_call.1}
  #allocation0 [shape = 'u32[]', space=smem, size = 0x4, offset = 0x4, fixed_abs, tag = 'smem constant byte address 0x4 - core index']
  #allocation1 [shape = 'u32[144,128]{1,0:T(1,128)}', space=vmem, size = 0x12000, scoped, tag = 'internal scratch']
  #allocation2 [shape = 'f32[128,128]{1,0:T(8,128)}', space=vmem, size = 0x10000, scoped, tag = 'scratch operand']
  #allocation3 [shape = 'f32[8,128]{1,0:T(8,128)}', space=vmem, size = 0x1000, scoped, tag = 'scratch operand']
  %s0 = inlined_call_operand.hbm [shape: f32[8,128], index: 0, kind: input, shape index: {}]
  %s1 = inlined_call_operand.hbm [shape: f32[3,128,128], index: 1, kind: input, shape index: {}]
  %s2 = inlined_call_operand.vmem [shape: f32[1,128], index: 2, kind: input, shape index: {}]
  %s3 = inlined_call_operand.hbm [shape: f32[8,128], index: 3, kind: output, shape index: {}]
  %s4 = sld [smem:[#allocation0]]
  $region73: #{tpu_custom_call.1} parent=0
    _
  %s6 = ssub.s32 1, %s4
  %s7 = scalar_select 0, %s6, %s4
  $region1: #{tpu_custom_call.1} parent=0
    #allocation4 [shape = 'u8[4096]{0}', space=vmem, size = 0x1000, scoped, tag = 'input window, operand 0, single buffered']
    #allocation5 [shape = 's32[2]{0}', space=sflag, size = 0x8, scoped, tag = 'scoped memory for tpu_custom_call.1']
    #allocation6 [shape = 's32[2]{0}', space=sflag, size = 0x8, scoped, tag = 'scoped memory for tpu_custom_call.1']
    #allocation7 [shape = 'u8[131072]{0}', space=vmem, size = 0x20000, scoped, tag = 'input window, operand 1']
    #allocation8 [shape = 's32[2]{0}', space=sflag, size = 0x8, scoped, tag = 'scoped memory for tpu_custom_call.1']
    #allocation9 [shape = 'u8[4096]{0}', space=vmem, size = 0x1000, scoped, tag = 'output window, operand 0, single buffered']
    %8 = vsyncpa [#allocation5], 0
    %9 = vsyncpa [#allocation8], 0
    %s10 = scalar_lea.sflag [#allocation8], 1
    %11 = vsyncpa %s10, 0
    %12 = vsyncpa [#allocation6], 0
    loop: start=0, step=1, limit=5
    $region2: #{tpu_custom_call.1} parent=1 // loop_pre_header
      _
    $region3: #{tpu_custom_call.1} parent=1 // loop_header
      %s14 = sphi 0, %s18
      %p15 = scmp.ge.s32.totalorder %s14, 5
      %s21 = sphi 0, %s47
      %s22 = sphi 0, %s43
      %s23 = sphi 0, %s39
      %s24 = sphi 0, %s35
      %s25 = sphi 0, %s21
      %s26 = sphi 0, %s22
      %s27 = sphi 0, %s23
      %s28 = sphi 0, %s24
      %s29 = sphi 0, %s25
      %s30 = sphi 0, %s26
      %s31 = sphi 0, %s27
      %s32 = sphi 0, %s28
      %s52 = sphi 0, %s54
      %s55 = sphi 0, %s52
      %s56 = sphi 0, %s55
      %s72 = sphi 0, %s56
      %s82 = sphi 0, %s84
      %s85 = sphi 0, %s82
      %s86 = sphi 0, %s85
      %s102 = sphi 0, %s86
      %s108 = sphi 0, %s110
      %s111 = sphi 0, %s108
      %s112 = sphi 0, %s111
      %s128 = sphi 0, %s112
      %s136 = sphi 0, %s138
      %s139 = sphi 0, %s136
      %s140 = sphi 0, %s139
      %s156 = sphi 0, %s140
    $region4: #{tpu_custom_call.1} parent=1 // loop_header_branch
      %17 = sbr.rel (%p15) target = $region8
    $region5: #{tpu_custom_call.1} parent=1 // loop_body
      %s19 = ssub.s32 %s14, 1
      %s20 = ssub.s32 %s14, 2
      %s33 = sadd.s32 1, %s24
      %p34 = scmp.ge.s32.totalorder %s33, 3
      %s35 = scalar_select %p34, 0, %s33
      %s36 = sadd.s32 1, %s23
      %s37 = scalar_select %p34, %s36, %s23
      %p38 = scmp.ge.s32.totalorder %s37, 1
      %s39 = scalar_select %p38, 0, %s37
      %s40 = sadd.s32 1, %s22
      %s41 = scalar_select %p38, %s40, %s22
      %p42 = scmp.ge.s32.totalorder %s41, 1
      %s43 = scalar_select %p42, 0, %s41
      %s44 = sadd.s32 1, %s21
      %s45 = scalar_select %p42, %s44, %s21
      %p46 = scmp.ge.s32.totalorder %s45, 1
      %s47 = scalar_select %p46, 0, %s45
      %s48 = ssub.s32 %s21, %s47
      %s49 = ssub.s32 %s23, %s39
      %s50 = sor.u32 %s48, %s49
      %p51 = scmp.eq.s32.totalorder %s50, 0
      %s53 = sadd.s32 %s52, 1
      %s54 = scalar_select %p51, %s52, %s53
      %p57 = pneg %p51
      %p58 = scmp.eq.s32.totalorder %s14, 2
      %p59 = por %p57, %p58
      %p60 = scmp.ne.s32.totalorder %s52, %s55
      %p61 = scmp.eq.s32.totalorder %s14, 0
      %p62 = por %p60, %p61
      %p63 = scmp.ne.s32.totalorder %s52, %s55
      %p64 = scmp.eq.s32.totalorder %s19, 2
      %p65 = por %p63, %p64
      %p66 = scmp.ne.s32.totalorder %s55, %s56
      %p67 = scmp.eq.s32.totalorder %s19, 0
      %p68 = por %p66, %p67
      %p69 = scmp.ne.s32.totalorder %s55, %s56
      %p70 = scmp.eq.s32.totalorder %s20, 2
      %p71 = por %p69, %p70
      %p73 = scmp.ne.s32.totalorder %s56, %s72
      %p74 = scmp.eq.s32.totalorder %s20, 0
      %p75 = por %p73, %p74
      %s76 = ssub.s32 %s24, %s35
      %s77 = ssub.s32 %s22, %s43
      %s78 = sor.u32 %s76, %s77
      %s79 = ssub.s32 %s23, %s39
      %s80 = sor.u32 %s78, %s79
      %p81 = scmp.eq.s32.totalorder %s80, 0
      %s83 = sadd.s32 %s82, 1
      %s84 = scalar_select %p81, %s82, %s83
      %p87 = pneg %p81
      %p88 = scmp.eq.s32.totalorder %s14, 2
      %p89 = por %p87, %p88
      %p90 = scmp.ne.s32.totalorder %s82, %s85
      %p91 = scmp.eq.s32.totalorder %s14, 0
      %p92 = por %p90, %p91
      %p93 = scmp.ne.s32.totalorder %s82, %s85
      %p94 = scmp.eq.s32.totalorder %s19, 2
      %p95 = por %p93, %p94
      %p96 = scmp.ne.s32.totalorder %s85, %s86
      %p97 = scmp.eq.s32.totalorder %s19, 0
      %p98 = por %p96, %p97
      %p99 = scmp.ne.s32.totalorder %s85, %s86
      %p100 = scmp.eq.s32.totalorder %s20, 2
      %p101 = por %p99, %p100
      %p103 = scmp.ne.s32.totalorder %s86, %s102
      %p104 = scmp.eq.s32.totalorder %s20, 0
      %p105 = por %p103, %p104
      %s106 = ssub.s32 %s22, %s43
      %p107 = scmp.eq.s32.totalorder %s106, 0
      %s109 = sadd.s32 %s108, 1
      %s110 = scalar_select %p107, %s108, %s109
      %p113 = pneg %p107
      %p114 = scmp.eq.s32.totalorder %s14, 2
      %p115 = por %p113, %p114
      %p116 = scmp.ne.s32.totalorder %s108, %s111
      %p117 = scmp.eq.s32.totalorder %s14, 0
      %p118 = por %p116, %p117
      %p119 = scmp.ne.s32.totalorder %s108, %s111
      %p120 = scmp.eq.s32.totalorder %s19, 2
      %p121 = por %p119, %p120
      %p122 = scmp.ne.s32.totalorder %s111, %s112
      %p123 = scmp.eq.s32.totalorder %s19, 0
      %p124 = por %p122, %p123
      %p125 = scmp.ne.s32.totalorder %s111, %s112
      %p126 = scmp.eq.s32.totalorder %s20, 2
      %p127 = por %p125, %p126
      %p129 = scmp.ne.s32.totalorder %s112, %s128
      %p130 = scmp.eq.s32.totalorder %s20, 0
      %p131 = por %p129, %p130
      %s132 = ssub.s32 %s21, %s47
      %s133 = ssub.s32 %s22, %s43
      %s134 = sor.u32 %s132, %s133
      %p135 = scmp.eq.s32.totalorder %s134, 0
      %s137 = sadd.s32 %s136, 1
      %s138 = scalar_select %p135, %s136, %s137
      %p141 = pneg %p135
      %p142 = scmp.eq.s32.totalorder %s14, 2
      %p143 = por %p141, %p142
      %p144 = scmp.ne.s32.totalorder %s136, %s139
      %p145 = scmp.eq.s32.totalorder %s14, 0
      %p146 = por %p144, %p145
      %p147 = scmp.ne.s32.totalorder %s136, %s139
      %p148 = scmp.eq.s32.totalorder %s19, 2
      %p149 = por %p147, %p148
      %p150 = scmp.ne.s32.totalorder %s139, %s140
      %p151 = scmp.eq.s32.totalorder %s19, 0
      %p152 = por %p150, %p151
      %p153 = scmp.ne.s32.totalorder %s139, %s140
      %p154 = scmp.eq.s32.totalorder %s20, 2
      %p155 = por %p153, %p154
      %p157 = scmp.ne.s32.totalorder %s140, %s156
      %p158 = scmp.eq.s32.totalorder %s20, 0
      %p159 = por %p157, %p158
      %p160 = scmp.le.s32.totalorder 1, %s14
      %p161 = scmp.lt.s32.totalorder %s14, 4
      %p162 = pnand %p160, %p161
      %p163 = pneg %p162
      // Predicated region
      $region9: #{tpu_custom_call.1} parent=5 // pred_check
        _
      $region10: #{tpu_custom_call.1} parent=5 // pred_check_branch
        %165 = sbr.rel (%p162) target = $region12
      $region11: #{tpu_custom_call.1} parent=5 // pred_region
        %s166 = ssub.s32 %s14, 1
        // Predicated region
        $region13: #{tpu_custom_call.1} parent=11 // pred_check
          %p167 = pneg %p68
        $region14: #{tpu_custom_call.1} parent=11 // pred_check_branch
          %169 = sbr.rel (%p167) target = $region16
        $region15: #{tpu_custom_call.1} parent=11 // pred_region
          %s171 = ssub.s32 128, 128
          %172 = vsyncadd [#allocation5], %s171
          %s173 = sadd.s32 %s27, %s25
          %s174 = smul.addr %s173, 128
          %s175 = scalar_lea.hbm %s0, %s174
          %s177 = sshll.u32 [#allocation4], 4
          %s178 = int_to_ptr.vmem [resolvable:$true] %s177
          %180 = dma.hbm_to_vmem [thread:$0]  %s175, 128, %s178, [#allocation5]
        $region16: #{tpu_custom_call.1} parent=11 // pred_fallthru
          _
        // Predicated region
        $region17: #{tpu_custom_call.1} parent=11 // pred_check
          %p181 = pneg %p124
        $region18: #{tpu_custom_call.1} parent=11 // pred_check_branch
          %183 = sbr.rel (%p181) target = $region20
        $region19: #{tpu_custom_call.1} parent=11 // pred_region
          %p184 = scmp.lt.s32.totalorder %s26, 0
          %s185 = scalar_select %p184, %s26, 0
          %s186 = scalar_lea.vmem %s2, %s185
        $region20: #{tpu_custom_call.1} parent=11 // pred_fallthru
          _
      $region12: #{tpu_custom_call.1} parent=5 // pred_fallthru
        _
      %p187 = scmp.lt.s32.totalorder %s14, 3
      // Predicated region
      $region21: #{tpu_custom_call.1} parent=5 // pred_check
        %p188 = pneg %p187
      $region22: #{tpu_custom_call.1} parent=5 // pred_check_branch
        %190 = sbr.rel (%p188) target = $region24
      $region23: #{tpu_custom_call.1} parent=5 // pred_region
        // Predicated region
        $region25: #{tpu_custom_call.1} parent=23 // pred_check
          %p191 = pneg %p92
        $region26: #{tpu_custom_call.1} parent=23 // pred_check_branch
          %193 = sbr.rel (%p191) target = $region28
        $region27: #{tpu_custom_call.1} parent=23 // pred_region
          %s194 = sand.u32 %s82, 1
          %s195 = scalar_lea.sflag [#allocation8], %s194
          %s196 = sand.u32 %s82, 1
          %s197 = smul.addr %s196, 128
          %s198 = scalar_lea.vmem [#allocation7], %s197
          %s199 = smul.u32 16, %s22
          %s201 = ssub.s32 2048, 2048
          %202 = vsyncadd %s195, %s201
          %s203 = sadd.s32 %s23, %s199
          %s204 = smul.addr %s24, 16
          %s205 = sadd.s32 %s203, %s204
          %s206 = smul.addr %s205, 128
          %s207 = scalar_lea.hbm %s1, %s206
          %s208 = sshll.u32 %s198, 4
          %s209 = int_to_ptr.vmem [resolvable:$true] %s208
          %214 = dma.hbm_to_vmem [thread:$0]  %s207, 2048, %s209, %s195, 128, 128, 8
        $region28: #{tpu_custom_call.1} parent=23 // pred_fallthru
          _
      $region24: #{tpu_custom_call.1} parent=5 // pred_fallthru
        _
      %p215 = scmp.le.s32.totalorder 1, %s14
      %p216 = scmp.lt.s32.totalorder %s14, 4
      %p217 = pnand %p215, %p216
      %p218 = pneg %p217
      // Predicated region
      $region29: #{tpu_custom_call.1} parent=5 // pred_check
        _
      $region30: #{tpu_custom_call.1} parent=5 // pred_check_branch
        %220 = sbr.rel (%p217) target = $region32
      $region31: #{tpu_custom_call.1} parent=5 // pred_region
        %s221 = ssub.s32 %s14, 1
        // Predicated region
        $region33: #{tpu_custom_call.1} parent=31 // pred_check
          %p222 = pneg %p68
        $region34: #{tpu_custom_call.1} parent=31 // pred_check_branch
          %224 = sbr.rel (%p222) target = $region36
        $region35: #{tpu_custom_call.1} parent=31 // pred_region
          %225 = dma.done [#allocation5], 128
        $region36: #{tpu_custom_call.1} parent=31 // pred_fallthru
          _
        %s226 = sand.u32 %s85, 1
        %s227 = scalar_lea.sflag [#allocation8], %s226
        %s228 = sand.u32 %s85, 1
        %s229 = smul.addr %s228, 128
        %s230 = scalar_lea.vmem [#allocation7], %s229
        // Predicated region
        $region37: #{tpu_custom_call.1} parent=31 // pred_check
          %p231 = pneg %p98
        $region38: #{tpu_custom_call.1} parent=31 // pred_check_branch
          %233 = sbr.rel (%p231) target = $region40
        $region39: #{tpu_custom_call.1} parent=31 // pred_region
          %234 = dma.done %s227, 2048
        $region40: #{tpu_custom_call.1} parent=31 // pred_fallthru
          _
        %p235 = pneg %p68
        %p236 = pneg %p65
        %s237 = sand.u32 %s85, 1
        %s238 = scalar_lea.sflag [#allocation8], %s237
        %s239 = sand.u32 %s85, 1
        %s240 = smul.addr %s239, 128
        %s241 = scalar_lea.vmem [#allocation7], %s240
        %p242 = pneg %p98
        %p243 = pneg %p95
        %p244 = scmp.lt.s32.totalorder %s26, 0
        %s245 = scalar_select %p244, %s26, 0
        %s246 = scalar_lea.vmem %s2, %s245
        %p247 = pneg %p124
        %p248 = pneg %p121
        %p249 = pneg %p152
        %p250 = pneg %p149
        %s251 = smul.u32 16, %s26
        %p252 = scmp.lt.s32.totalorder %s26, 0
        %s253 = scalar_select %p252, %s26, 0
        %s254 = scalar_lea.vmem %s2, %s253
        %p255 = scmp.eq.s32.totalorder %s28, 0
        // Predicated region
        $region41: #{tpu_custom_call.1} parent=31 // pred_check
          %p256 = pneg %p255
        $region42: #{tpu_custom_call.1} parent=31 // pred_check_branch
          %258 = sbr.rel (%p256) target = $region44
        $region43: #{tpu_custom_call.1} parent=31 // pred_region
          %v259 = vld [vmem:[%s230] sm:$0xff]
          %v260 = vld [vmem:[%s230 + $0x8] sm:$0xff]
          %v261 = vld [vmem:[%s230 + $0x10] sm:$0xff]
          %v262 = vld [vmem:[%s230 + $0x18] sm:$0xff]
          %v263 = vld [vmem:[%s230 + $0x20] sm:$0xff]
          %v264 = vld [vmem:[%s230 + $0x28] sm:$0xff]
          %v265 = vld [vmem:[%s230 + $0x30] sm:$0xff]
          %v266 = vld [vmem:[%s230 + $0x38] sm:$0xff]
          %v267 = vld [vmem:[%s230 + $0x40] sm:$0xff]
          %v268 = vld [vmem:[%s230 + $0x48] sm:$0xff]
          %v269 = vld [vmem:[%s230 + $0x50] sm:$0xff]
          %v270 = vld [vmem:[%s230 + $0x58] sm:$0xff]
          %v271 = vld [vmem:[%s230 + $0x60] sm:$0xff]
          %v272 = vld [vmem:[%s230 + $0x68] sm:$0xff]
          %v273 = vld [vmem:[%s230 + $0x70] sm:$0xff]
          %v274 = vld [vmem:[%s230 + $0x78] sm:$0xff]
          %275 = vst [vmem:[#allocation2] sm:$0xff] %v259
          %276 = vst [vmem:[#allocation2 + $0x8] sm:$0xff] %v260
          %277 = vst [vmem:[#allocation2 + $0x10] sm:$0xff] %v261
          %278 = vst [vmem:[#allocation2 + $0x18] sm:$0xff] %v262
          %279 = vst [vmem:[#allocation2 + $0x20] sm:$0xff] %v263
          %280 = vst [vmem:[#allocation2 + $0x28] sm:$0xff] %v264
          %281 = vst [vmem:[#allocation2 + $0x30] sm:$0xff] %v265
          %282 = vst [vmem:[#allocation2 + $0x38] sm:$0xff] %v266
          %283 = vst [vmem:[#allocation2 + $0x40] sm:$0xff] %v267
          %284 = vst [vmem:[#allocation2 + $0x48] sm:$0xff] %v268
          %285 = vst [vmem:[#allocation2 + $0x50] sm:$0xff] %v269
          %286 = vst [vmem:[#allocation2 + $0x58] sm:$0xff] %v270
          %287 = vst [vmem:[#allocation2 + $0x60] sm:$0xff] %v271
          %288 = vst [vmem:[#allocation2 + $0x68] sm:$0xff] %v272
          %289 = vst [vmem:[#allocation2 + $0x70] sm:$0xff] %v273
          %290 = vst [vmem:[#allocation2 + $0x78] sm:$0xff] %v274
        $region44: #{tpu_custom_call.1} parent=31 // pred_fallthru
          _
        %p291 = scmp.gt.s32.totalorder %s28, 0
        // Predicated region
        $region45: #{tpu_custom_call.1} parent=31 // pred_check
          %p292 = pneg %p291
        $region46: #{tpu_custom_call.1} parent=31 // pred_check_branch
          %294 = sbr.rel (%p292) target = $region48
        $region47: #{tpu_custom_call.1} parent=31 // pred_region
          %v295 = vld [vmem:[#allocation2] sm:$0xff]
          %v296 = vld [vmem:[#allocation2 + $0x8] sm:$0xff]
          %v297 = vld [vmem:[#allocation2 + $0x10] sm:$0xff]
          %v298 = vld [vmem:[#allocation2 + $0x18] sm:$0xff]
          %v299 = vld [vmem:[#allocation2 + $0x20] sm:$0xff]
          %v300 = vld [vmem:[#allocation2 + $0x28] sm:$0xff]
          %v301 = vld [vmem:[#allocation2 + $0x30] sm:$0xff]
          %v302 = vld [vmem:[#allocation2 + $0x38] sm:$0xff]
          %v303 = vld [vmem:[#allocation2 + $0x40] sm:$0xff]
          %v304 = vld [vmem:[#allocation2 + $0x48] sm:$0xff]
          %v305 = vld [vmem:[#allocation2 + $0x50] sm:$0xff]
          %v306 = vld [vmem:[#allocation2 + $0x58] sm:$0xff]
          %v307 = vld [vmem:[#allocation2 + $0x60] sm:$0xff]
          %v308 = vld [vmem:[#allocation2 + $0x68] sm:$0xff]
          %v309 = vld [vmem:[#allocation2 + $0x70] sm:$0xff]
          %v310 = vld [vmem:[#allocation2 + $0x78] sm:$0xff]
          %v311 = vld [vmem:[%s230] sm:$0xff]
          %v312 = vld [vmem:[%s230 + $0x8] sm:$0xff]
          %v313 = vld [vmem:[%s230 + $0x10] sm:$0xff]
          %v314 = vld [vmem:[%s230 + $0x18] sm:$0xff]
          %v315 = vld [vmem:[%s230 + $0x20] sm:$0xff]
          %v316 = vld [vmem:[%s230 + $0x28] sm:$0xff]
          %v317 = vld [vmem:[%s230 + $0x30] sm:$0xff]
          %v318 = vld [vmem:[%s230 + $0x38] sm:$0xff]
          %v319 = vld [vmem:[%s230 + $0x40] sm:$0xff]
          %v320 = vld [vmem:[%s230 + $0x48] sm:$0xff]
          %v321 = vld [vmem:[%s230 + $0x50] sm:$0xff]
          %v322 = vld [vmem:[%s230 + $0x58] sm:$0xff]
          %v323 = vld [vmem:[%s230 + $0x60] sm:$0xff]
          %v324 = vld [vmem:[%s230 + $0x68] sm:$0xff]
          %v325 = vld [vmem:[%s230 + $0x70] sm:$0xff]
          %v326 = vld [vmem:[%s230 + $0x78] sm:$0xff]
          %v327 = vadd.f32 %v295, %v311
          %v328 = vadd.f32 %v296, %v312
          %v329 = vadd.f32 %v297, %v313
          %v330 = vadd.f32 %v298, %v314
          %v331 = vadd.f32 %v299, %v315
          %v332 = vadd.f32 %v300, %v316
          %v333 = vadd.f32 %v301, %v317
          %v334 = vadd.f32 %v302, %v318
          %v335 = vadd.f32 %v303, %v319
          %v336 = vadd.f32 %v304, %v320
          %v337 = vadd.f32 %v305, %v321
          %v338 = vadd.f32 %v306, %v322
          %v339 = vadd.f32 %v307, %v323
          %v340 = vadd.f32 %v308, %v324
          %v341 = vadd.f32 %v309, %v325
          %v342 = vadd.f32 %v310, %v326
          %343 = vst [vmem:[#allocation2] sm:$0xff] %v327
          %344 = vst [vmem:[#allocation2 + $0x8] sm:$0xff] %v328
          %345 = vst [vmem:[#allocation2 + $0x10] sm:$0xff] %v329
          %346 = vst [vmem:[#allocation2 + $0x18] sm:$0xff] %v330
          %347 = vst [vmem:[#allocation2 + $0x20] sm:$0xff] %v331
          %348 = vst [vmem:[#allocation2 + $0x28] sm:$0xff] %v332
          %349 = vst [vmem:[#allocation2 + $0x30] sm:$0xff] %v333
          %350 = vst [vmem:[#allocation2 + $0x38] sm:$0xff] %v334
          %351 = vst [vmem:[#allocation2 + $0x40] sm:$0xff] %v335
          %352 = vst [vmem:[#allocation2 + $0x48] sm:$0xff] %v336
          %353 = vst [vmem:[#allocation2 + $0x50] sm:$0xff] %v337
          %354 = vst [vmem:[#allocation2 + $0x58] sm:$0xff] %v338
          %355 = vst [vmem:[#allocation2 + $0x60] sm:$0xff] %v339
          %356 = vst [vmem:[#allocation2 + $0x68] sm:$0xff] %v340
          %357 = vst [vmem:[#allocation2 + $0x70] sm:$0xff] %v341
          %358 = vst [vmem:[#allocation2 + $0x78] sm:$0xff] %v342
        $region48: #{tpu_custom_call.1} parent=31 // pred_fallthru
          _
        %p359 = scmp.eq.s32.totalorder %s28, 2
        %p360 = scmp.eq.s32.totalorder %s27, 0
        %p361 = pnand %p359, %p360
        %p362 = pneg %p361
        // Predicated region
        $region49: #{tpu_custom_call.1} parent=31 // pred_check
          _
        $region50: #{tpu_custom_call.1} parent=31 // pred_check_branch
          %364 = sbr.rel (%p361) target = $region52
        $region51: #{tpu_custom_call.1} parent=31 // pred_region
          %v365 = vld [vmem:[%s254] sm:$0x1]
          %v367 = vlaneseq
          %v368 = vshrl.u32 %v367, 7
          %v369 = vsub.s32 0, %v368
          %v370 = vrot.slane %v365, %v369
          %372 = vst [vmem:[#allocation3] sm:$0xff] %v370
        $region52: #{tpu_custom_call.1} parent=31 // pred_fallthru
          _
        // Predicated region
        $region53: #{tpu_custom_call.1} parent=31 // pred_check
          %p373 = pneg %p359
        $region54: #{tpu_custom_call.1} parent=31 // pred_check_branch
          %375 = sbr.rel (%p373) target = $region56
        $region55: #{tpu_custom_call.1} parent=31 // pred_region
          %v376 = vld [vmem:[#allocation3] sm:$0xff]
          %v377 = vld [vmem:[#allocation4] sm:$0xff]
          %v378 = vld [vmem:[#allocation2] sm:$0xff]
          %v379 = vld [vmem:[#allocation2 + $0x8] sm:$0xff]
          %v380 = vld [vmem:[#allocation2 + $0x10] sm:$0xff]
          %v381 = vld [vmem:[#allocation2 + $0x18] sm:$0xff]
          %v382 = vld [vmem:[#allocation2 + $0x20] sm:$0xff]
          %v383 = vld [vmem:[#allocation2 + $0x28] sm:$0xff]
          %v384 = vld [vmem:[#allocation2 + $0x30] sm:$0xff]
          %v385 = vld [vmem:[#allocation2 + $0x38] sm:$0xff]
          %v386 = vld [vmem:[#allocation2 + $0x40] sm:$0xff]
          %v387 = vld [vmem:[#allocation2 + $0x48] sm:$0xff]
          %v388 = vld [vmem:[#allocation2 + $0x50] sm:$0xff]
          %v389 = vld [vmem:[#allocation2 + $0x58] sm:$0xff]
          %v390 = vld [vmem:[#allocation2 + $0x60] sm:$0xff]
          %v391 = vld [vmem:[#allocation2 + $0x68] sm:$0xff]
          %v392 = vld [vmem:[#allocation2 + $0x70] sm:$0xff]
          %v393 = vld [vmem:[#allocation2 + $0x78] sm:$0xff]
          %394 = vmatprep.subr.mxu0 0.0
          %395 = vmatpush1.xpose.msra.mxu0 %v393
          %396 = vmatprep.subr.mxu0 0.0
          %397 = vmatpush1.xpose.msra.mxu0 %v392
          %398 = vmatprep.subr.mxu0 0.0
          %399 = vmatpush1.xpose.msra.mxu0 %v391
          %400 = vmatprep.subr.mxu0 0.0
          %401 = vmatpush1.xpose.msra.mxu0 %v390
          %402 = vmatprep.subr.mxu0 0.0
          %403 = vmatpush1.xpose.msra.mxu0 %v389
          %404 = vmatprep.subr.mxu0 0.0
          %405 = vmatpush1.xpose.msra.mxu0 %v388
          %406 = vmatprep.subr.mxu0 0.0
          %407 = vmatpush1.xpose.msra.mxu0 %v387
          %408 = vmatprep.subr.mxu0 0.0
          %409 = vmatpush1.xpose.msra.mxu0 %v386
          %410 = vmatprep.subr.mxu0 0.0
          %411 = vmatpush1.xpose.msra.mxu0 %v385
          %412 = vmatprep.subr.mxu0 0.0
          %413 = vmatpush1.xpose.msra.mxu0 %v384
          %414 = vmatprep.subr.mxu0 0.0
          %415 = vmatpush1.xpose.msra.mxu0 %v383
          %416 = vmatprep.subr.mxu0 0.0
          %417 = vmatpush1.xpose.msra.mxu0 %v382
          %418 = vmatprep.subr.mxu0 0.0
          %419 = vmatpush1.xpose.msra.mxu0 %v381
          %420 = vmatprep.subr.mxu0 0.0
          %421 = vmatpush1.xpose.msra.mxu0 %v380
          %422 = vmatprep.subr.mxu0 0.0
          %423 = vmatpush1.xpose.msra.mxu0 %v379
          %424 = vmatprep.subr.mxu0 0.0
          %425 = vmatpush1.xpose.msra.mxu0 %v378
          %426 = vmatprep.subr.mxu0 0.0
          %427 = vmatpush2.xpose.msra.mxu0 0.0
          %428 = vmatprep.subr.mxu0 0.0
          %429 = vmatpush2.xpose.msra.mxu0 0.0
          %430 = vmatprep.subr.mxu0 0.0
          %431 = vmatpush2.xpose.msra.mxu0 0.0
          %432 = vmatprep.subr.mxu0 0.0
          %433 = vmatpush2.xpose.msra.mxu0 0.0
          %434 = vmatprep.subr.mxu0 0.0
          %435 = vmatpush2.xpose.msra.mxu0 0.0
          %436 = vmatprep.subr.mxu0 0.0
          %437 = vmatpush2.xpose.msra.mxu0 0.0
          %438 = vmatprep.subr.mxu0 0.0
          %439 = vmatpush2.xpose.msra.mxu0 0.0
          %440 = vmatprep.subr.mxu0 0.0
          %441 = vmatpush2.xpose.msra.mxu0 0.0
          %442 = vmatprep.subr.mxu0 0.0
          %443 = vmatpush2.xpose.msra.mxu0 0.0
          %444 = vmatprep.subr.mxu0 0.0
          %445 = vmatpush2.xpose.msra.mxu0 0.0
          %446 = vmatprep.subr.mxu0 0.0
          %447 = vmatpush2.xpose.msra.mxu0 0.0
          %448 = vmatprep.subr.mxu0 0.0
          %449 = vmatpush2.xpose.msra.mxu0 0.0
          %450 = vmatprep.subr.mxu0 0.0
          %451 = vmatpush2.xpose.msra.mxu0 0.0
          %452 = vmatprep.subr.mxu0 0.0
          %453 = vmatpush2.xpose.msra.mxu0 0.0
          %454 = vmatprep.subr.mxu0 0.0
          %455 = vmatpush2.xpose.msra.mxu0 0.0
          %456 = vmatprep.subr.mxu0 0.0
          %457 = vmatpush2.xpose.msra.mxu0 0.0
          %458 = vmatprep.mubr.f32.mxu0 0.0
          %459 = vmatmul.mubr.f32.gmra.mxu0 %v377
          %v460 = vpop.f32.mrf.mxu0
          %v461 = vadd.f32 0.0, %v460
          %v462 = vpop.f32.mrf.mxu0
          %463 = vdwg.mxu0
          %v464 = vadd.f32 %v376, %v461
          %465 = vst [vmem:[#allocation3] sm:$0xff] %v464
        $region56: #{tpu_custom_call.1} parent=31 // pred_fallthru
          _
        // Predicated region
        $region57: #{tpu_custom_call.1} parent=31 // pred_check
          _
        $region58: #{tpu_custom_call.1} parent=31 // pred_check_branch
          %467 = sbr.rel (%p361) target = $region60
        $region59: #{tpu_custom_call.1} parent=31 // pred_region
          %v468 = vld [vmem:[#allocation3] sm:$0xff]
          %469 = vst [vmem:[#allocation9] sm:$0xff] %v468
        $region60: #{tpu_custom_call.1} parent=31 // pred_fallthru
          _
        // Predicated region
        $region61: #{tpu_custom_call.1} parent=31 // pred_check
          %p470 = pneg %p149
        $region62: #{tpu_custom_call.1} parent=31 // pred_check_branch
          %472 = sbr.rel (%p470) target = $region64
        $region63: #{tpu_custom_call.1} parent=31 // pred_region
          %s474 = ssub.s32 128, 128
          %475 = vsyncadd [#allocation6], %s474
          %s476 = sadd.s32 %s26, %s25
          %s477 = smul.addr %s476, 128
          %s478 = scalar_lea.hbm %s3, %s477
          %s480 = sshll.u32 [#allocation9], 4
          %s481 = int_to_ptr.vmem [resolvable:$true] %s480
          %483 = dma.vmem_to_hbm [thread:$0]  %s481, 128, %s478, [#allocation6]
        $region64: #{tpu_custom_call.1} parent=31 // pred_fallthru
          _
        // Predicated region
        $region65: #{tpu_custom_call.1} parent=31 // pred_check
          %p484 = pneg %p149
        $region66: #{tpu_custom_call.1} parent=31 // pred_check_branch
          %486 = sbr.rel (%p484) target = $region68
        $region67: #{tpu_custom_call.1} parent=31 // pred_region
          %487 = dma.done [#allocation6], 128
        $region68: #{tpu_custom_call.1} parent=31 // pred_fallthru
          _
      $region32: #{tpu_custom_call.1} parent=5 // pred_fallthru
        _
      %p488 = scmp.le.s32.totalorder 2, %s14
      // Predicated region
      $region69: #{tpu_custom_call.1} parent=5 // pred_check
        %p489 = pneg %p488
      $region70: #{tpu_custom_call.1} parent=5 // pred_check_branch
        %491 = sbr.rel (%p489) target = $region72
      $region71: #{tpu_custom_call.1} parent=5 // pred_region
        %s492 = ssub.s32 %s14, 2
      $region72: #{tpu_custom_call.1} parent=5 // pred_fallthru
        _
    $region6: #{tpu_custom_call.1} parent=1 // loop_footer
      %s18 = sadd.s32 1, %s14
    $region7: #{tpu_custom_call.1} parent=1 // loop_footer_branch
      %13 = sbr.rel target = $region3
    $region8: #{tpu_custom_call.1} parent=1 // loop_exit
      _
    %493 = vsyncpa [#allocation5], 1
    %s494 = scalar_lea.sflag [#allocation5], 1
    %495 = vsyncpa %s494, 1
    %496 = vsyncpa [#allocation8], 1
    %s497 = scalar_lea.sflag [#allocation8], 1
    %498 = vsyncpa %s497, 1
    %499 = vsyncpa [#allocation6], 1
    %s500 = scalar_lea.sflag [#allocation6], 1
    %501 = vsyncpa %s500, 1

</llo_original>
